<compile_context>
chip_gen: v7x
topology: tpu7x:2x2x1
jax: 0.10.0
libtpu: 0.0.40
codegen_flags: <defaults>
</compile_context>

<pallas_src>
import functools
import math

import jax
import jax.numpy as jnp
from jax.experimental import pallas as pl
from jax.experimental.pallas import tpu as pltpu

EPS = 1e-5


def _gelu_exact(x):
    # PyTorch nn.GELU() default = exact erf formulation.
    return 0.5 * x * (1.0 + jax.lax.erf(x * (1.0 / math.sqrt(2.0))))


def _scoped_vmem_limit():
    """Per-core scoped VMEM limit derived from the hardware, with headroom."""
    cap = 64 * 1024 * 1024
    try:
        info = pltpu.get_tpu_info()
        cap = int(getattr(info, "vmem_capacity_bytes", cap)) or cap
    except Exception:
        pass
    # ~28% headroom for compiler-internal scratch; never ask for > 100 MiB.
    return min(int(cap * 0.72), 100 * 1024 * 1024)


def _pick_pixel_tile(hw_pad, stream_bytes_per_pixel, resident_bytes, budget):
    """Largest lane-aligned pixel tile whose multi-buffered streaming tiles plus
    resident (double-buffered) weights fit inside the VMEM budget."""
    for t in (2048, 1024, 512, 256, 128):
        if hw_pad % t == 0 and resident_bytes + stream_bytes_per_pixel * t <= budget:
            return t
    return min(hw_pad, 128)


# ---------------------------------------------------------------------------
# pass 1: conv1 (1x1) -> bf16 h1  +  per-batch per-channel sum / sumsq of h1
# ---------------------------------------------------------------------------
def _conv1_stats_kernel(x_ref, w1_ref, h1_ref, s_ref, ss_ref):
    @pl.when(pl.program_id(1) == 0)
    def _():
        s_ref[...] = jnp.zeros_like(s_ref)
        ss_ref[...] = jnp.zeros_like(ss_ref)

    x = x_ref[...].astype(jnp.bfloat16)                                 # (C_in, TP)
    h = jnp.dot(w1_ref[...], x, preferred_element_type=jnp.float32)     # (hid, TP) f32
    # conv1 bias omitted: exactly cancelled by the following training-mode BN.
    h1_ref[...] = h.astype(h1_ref.dtype)                                # bf16 store
    s_ref[...] += jnp.sum(h, axis=-1, keepdims=True)
    ss_ref[...] += jnp.sum(h * h, axis=-1, keepdims=True)


# ---------------------------------------------------------------------------
# pass 2: BN1 (precomputed scale/shift) + GELU + conv2 -> bf16 h2  + stats(h2)
# ---------------------------------------------------------------------------
def _bn_gelu_conv2_stats_kernel(tp, valid_hw, needs_mask,
                                h1_ref, a1_ref, c1_ref, w2_ref,
                                h2_ref, s_ref, ss_ref):
    @pl.when(pl.program_id(1) == 0)
    def _():
        s_ref[...] = jnp.zeros_like(s_ref)
        ss_ref[...] = jnp.zeros_like(ss_ref)

    h = h1_ref[...].astype(jnp.float32) * a1_ref[...] + c1_ref[...]     # (hid, TP)
    h = _gelu_exact(h)
    h2 = jnp.dot(w2_ref[...], h.astype(jnp.bfloat16),
                 preferred_element_type=jnp.float32)                    # (hid, TP) f32
    if needs_mask:  # zero padded pixel columns so they don't corrupt BN2 stats
        pix = jax.lax.broadcasted_iota(jnp.int32, h2.shape, 1) + pl.program_id(1) * tp
        h2 = jnp.where(pix < valid_hw, h2, 0.0)
    # conv2 bias omitted: exactly cancelled by the following training-mode BN.
    h2_ref[...] = h2.astype(h2_ref.dtype)                               # bf16 store
    s_ref[...] += jnp.sum(h2, axis=-1, keepdims=True)
    ss_ref[...] += jnp.sum(h2 * h2, axis=-1, keepdims=True)


# ---------------------------------------------------------------------------
# pass 3: BN2 (precomputed scale/shift) + GELU + conv3 + bias
# ---------------------------------------------------------------------------
def _bn_gelu_conv3_kernel(h2_ref, a2_ref, c2_ref, w3_ref, b3_ref, o_ref):
    h = h2_ref[...].astype(jnp.float32) * a2_ref[...] + c2_ref[...]     # (hid, TP)
    h = _gelu_exact(h)
    out = jnp.dot(w3_ref[...], h.astype(jnp.bfloat16),
                  preferred_element_type=jnp.float32) + b3_ref[...]     # (bot, TP)
    o_ref[...] = out.astype(o_ref.dtype)


def _bn_affine(s_per_batch, ss_per_batch, gamma, beta, inv_n):
    """Fused training-mode BN scale/shift from per-batch partial sums."""
    s = jnp.sum(s_per_batch, axis=0)                                    # (hid, 1)
    ss = jnp.sum(ss_per_batch, axis=0)
    mean = s * inv_n
    var = jnp.maximum(ss * inv_n - mean * mean, 0.0)                    # clamp >= 0
    a = gamma * jax.lax.rsqrt(var + EPS)
    c = beta - mean * a
    return a, c


def dino_head_2d(x_nchw, params):
    """x_nchw: (N, C_in, H, W) float32 -> (N, bottleneck, H, W) float32."""
    N, C, H, W = x_nchw.shape
    HW = H * W
    hid = params["w1"].shape[0]
    bot = params["w3"].shape[0]
    inv_n = 1.0 / float(N * HW)
    f32, bf16 = jnp.float32, jnp.bfloat16

    # Pad the flattened pixel axis to a lane multiple for lane-dense DMA.
    HW_pad = ((HW + 127) // 128) * 128
    pad = HW_pad - HW
    P_pad = N * HW_pad

    x = x_nchw.reshape(N, C, HW)                      # free reshape, no transpose
    if pad:
        x = jnp.pad(x, ((0, 0), (0, 0), (0, pad)))    # zero pads -> h1 == 0 there

    # Weights -> bf16 once (PyTorch (C_out, C_in) 1x1 layout kept as-is).
    w1 = params["w1"].astype(bf16)
    w2 = params["w2"].astype(bf16)
    w3 = params["w3"].astype(bf16)
    g1 = params["g1"].reshape(hid, 1).astype(f32)
    be1 = params["be1"].reshape(hid, 1).astype(f32)
    g2 = params["g2"].reshape(hid, 1).astype(f32)
    be2 = params["be2"].reshape(hid, 1).astype(f32)
    b3 = params["b3"].reshape(bot, 1).astype(f32)

    # ---- VMEM budget & per-pass pixel-tile sizes ---------------------------
    vmem_limit = _scoped_vmem_limit()
    # Lane-padded (hid,1)->(hid,128) stat/param blocks + general headroom.
    fixed = (2 * 2 * hid * 128 * 4            # two double-buffered stat outputs
             + 4 * 2 * max(hid, bot) * 128 * 4  # small resident per-channel vectors
             + (4 << 20))
    budget = max(vmem_limit - fixed, 1 << 20)

    # Streaming bytes/pixel (incl. buffering) & double-buffered resident weights.
    stream1 = 2 * (4 * C) + 2 * (2 * hid)          # x f32 in (x2) + h1 bf16 out (x2)
    res1 = 2 * (2 * hid * C)
    stream2 = 2 * (2 * hid) + 2 * (2 * hid)        # h1 bf16 in (x2) + h2 bf16 out (x2)
    res2 = 2 * (2 * hid * hid)
    stream3 = 3 * (2 * hid) + 2 * (4 * bot)        # h2 bf16 in (x3) + out f32 (x2)
    res3 = 2 * (2 * bot * hid)

    TP1 = _pick_pixel_tile(HW_pad, stream1, res1, budget)
    TP2 = _pick_pixel_tile(HW_pad, stream2, res2, budget)
    TP3 = _pick_pixel_tile(HW_pad, stream3, res3, budget)

    # ---- BlockSpec helpers ---------------------------------------------------
    def tiled(ch, tp, buffers=None):
        idx = lambda n, t: (n, 0, t)
        if buffers is not None and hasattr(pl, "Buffered"):
            try:
                return pl.BlockSpec((None, ch, tp), idx, pipeline_mode=pl.Buffered(buffers))
            except TypeError:
                pass  # older API without pipeline_mode: fall back to default depth
        return pl.BlockSpec((None, ch, tp), idx)

    def resident(shape):
        return pl.BlockSpec(shape, lambda n, t: tuple(0 for _ in shape))

    def stat_spec():
        return pl.BlockSpec((None, hid, 1), lambda n, t: (n, 0, 0))

    stat_shape = jax.ShapeDtypeStruct((N, hid, 1), f32)

    # ---- pass 1: conv1 + BN1 per-batch statistics ---------------------------
    h1, s1_nb, ss1_nb = pl.pallas_call(
        _conv1_stats_kernel,
        grid=(N, HW_pad // TP1),
        in_specs=[tiled(C, TP1), resident((hid, C))],
        out_specs=[tiled(hid, TP1), stat_spec(), stat_spec()],
        out_shape=[jax.ShapeDtypeStruct((N, hid, HW_pad), bf16), stat_shape, stat_shape],
        compiler_params=pltpu.CompilerParams(
            dimension_semantics=("parallel", "arbitrary"),   # stats are per-batch
            vmem_limit_bytes=vmem_limit),
        cost_estimate=pl.CostEstimate(
            flops=2 * P_pad * C * hid,
            transcendentals=0,
            bytes_accessed=4 * P_pad * C + 2 * hid * C + 2 * P_pad * hid + 8 * N * hid),
    )(x, w1)
    a1, c1 = _bn_affine(s1_nb, ss1_nb, g1, be1, inv_n)

    # ---- pass 2: BN1 + GELU + conv2 + BN2 per-batch statistics ---------------
    h2, s2_nb, ss2_nb = pl.pallas_call(
        functools.partial(_bn_gelu_conv2_stats_kernel, TP2, HW, pad > 0),
        grid=(N, HW_pad // TP2),
        in_specs=[tiled(hid, TP2), resident((hid, 1)), resident((hid, 1)),
                  resident((hid, hid))],
        out_specs=[tiled(hid, TP2), stat_spec(), stat_spec()],
        out_shape=[jax.ShapeDtypeStruct((N, hid, HW_pad), bf16), stat_shape, stat_shape],
        compiler_params=pltpu.CompilerParams(
            dimension_semantics=("parallel", "arbitrary"),
            vmem_limit_bytes=vmem_limit),
        cost_estimate=pl.CostEstimate(
            flops=2 * P_pad * hid * hid + 6 * P_pad * hid,
            transcendentals=P_pad * hid,
            bytes_accessed=4 * P_pad * hid + 2 * hid * hid + 8 * N * hid + 16 * hid),
    )(h1, a1, c1, w2)
    a2, c2 = _bn_affine(s2_nb, ss2_nb, g2, be2, inv_n)

    # ---- pass 3: BN2 + GELU + conv3 + bias (memory-bound: 3-deep h2 buffering)
    out = pl.pallas_call(
        _bn_gelu_conv3_kernel,
        grid=(N, HW_pad // TP3),
        in_specs=[tiled(hid, TP3, buffers=3), resident((hid, 1)), resident((hid, 1)),
                  resident((bot, hid)), resident((bot, 1))],
        out_specs=tiled(bot, TP3),
        out_shape=jax.ShapeDtypeStruct((N, bot, HW_pad), x_nchw.dtype),
        compiler_params=pltpu.CompilerParams(
            dimension_semantics=("parallel", "parallel"),     # no carried state
            vmem_limit_bytes=vmem_limit),
        cost_estimate=pl.CostEstimate(
            flops=2 * P_pad * hid * bot + 6 * P_pad * hid,
            transcendentals=P_pad * hid,
            bytes_accessed=2 * P_pad * hid + 2 * bot * hid + 4 * P_pad * bot + 12 * hid),
    )(h2, a2, c2, w3, b3)

    if pad:
        out = out[:, :, :HW]
    return out.reshape(N, bot, H, W)


def init_params(key, in_dim, hidden_dim, bottleneck_dim):
    """Mirrors DINOHead2d._init_weights: trunc_normal(std=0.02) conv weights,
    zero biases, BN gamma=1 / beta=0.  Conv weights use PyTorch's (C_out, C_in)
    1x1 layout."""
    k1, k2, k3 = jax.random.split(key, 3)

    def trunc(k, shape):
        # trunc_normal_(std=0.02, a=-2, b=2): +/-2 truncation is ~a no-op at std=0.02.
        return 0.02 * jax.random.truncated_normal(k, -2.0, 2.0, shape, jnp.float32)

    return {
        "w1": trunc(k1, (hidden_dim, in_dim)),
        "b1": jnp.zeros((hidden_dim,), jnp.float32),   # cancelled exactly by BN1
        "g1": jnp.ones((hidden_dim,), jnp.float32),
        "be1": jnp.zeros((hidden_dim,), jnp.float32),
        "w2": trunc(k2, (hidden_dim, hidden_dim)),
        "b2": jnp.zeros((hidden_dim,), jnp.float32),   # cancelled exactly by BN2
        "g2": jnp.ones((hidden_dim,), jnp.float32),
        "be2": jnp.zeros((hidden_dim,), jnp.float32),
        "w3": trunc(k3, (bottleneck_dim, hidden_dim)),
        "b3": jnp.zeros((bottleneck_dim,), jnp.float32),
    }


def _reference(x_nchw, params):
    """Pure-JAX f32 reference of the module's training-mode forward pass."""
    N, C, H, W = x_nchw.shape
    h = x_nchw.reshape(N, C, H * W)

    def conv(v, w, b):                      # 1x1 conv == channel matmul
        return jnp.einsum("oc,ncp->nop", w, v) + b[None, :, None]

    def bn(v, g, b):                        # training-mode BN2d, biased variance
        mean = jnp.mean(v, axis=(0, 2), keepdims=True)
        var = jnp.mean((v - mean) ** 2, axis=(0, 2), keepdims=True)
        return (v - mean) * jax.lax.rsqrt(var + EPS) * g[None, :, None] + b[None, :, None]

    h = _gelu_exact(bn(conv(h, params["w1"], params["b1"]), params["g1"], params["be1"]))
    h = _gelu_exact(bn(conv(h, params["w2"], params["b2"]), params["g2"], params["be2"]))
    h = conv(h, params["w3"], params["b3"])
    return h.reshape(N, -1, H, W)


if __name__ == "__main__":
    # Small shapes consistent with the module (scaled-down hidden/bottleneck dims).
    N, C_IN, H, W = 2, 4, 16, 16
    HIDDEN, BOTTLENECK = 32, 16

    key = jax.random.PRNGKey(0)
    kx, kp = jax.random.split(key)
    x = jax.random.normal(kx, (N, C_IN, H, W), jnp.float32)
    params = init_params(kp, C_IN, HIDDEN, BOTTLENECK)

    out = jax.block_until_ready(dino_head_2d(x, params))
    ref = _reference(x, params)

    assert out.shape == (N, BOTTLENECK, H, W)
    # bf16 MXU feeds + bf16 inter-pass activations (f32 accumulation) => compare
    # against the pure-f32 reference with a bf16-appropriate tolerance.
    assert jnp.allclose(out, ref, atol=3e-2, rtol=3e-2), "mismatch vs JAX reference"

    print("KERNEL_OK")
</pallas_src>

<mosaic_0001>
module attributes {stable_mosaic.version = 11 : i64} {
  func.func @_conv1_stats_kernel(%arg0: i32, %arg1: i32, %arg2: memref<1x4x256xf32, #tpu.memory_space<vmem>>, %arg3: memref<32x4xbf16, #tpu.memory_space<vmem>>, %arg4: memref<1x32x256xbf16, #tpu.memory_space<vmem>>, %arg5: memref<1x32x1xf32, #tpu.memory_space<vmem>>, %arg6: memref<1x32x1xf32, #tpu.memory_space<vmem>>) attributes {dimension_semantics = [#tpu.dimension_semantics<parallel>, #tpu.dimension_semantics<arbitrary>], iteration_bounds = array<i64: 2, 1>, scalar_prefetch = 0 : i64, scratch_operands = 0 : i64, tpu.core_type = #tpu.core_type<tc>, window_params = [{transform_indices = @transform_0, window_bounds = array<i64: 1, 4, 256>}, {pipeline_mode = #tpu.pipeline_mode<synchronous>, transform_indices = @transform_1, window_bounds = array<i64: 32, 4>}, {transform_indices = @transform_2, window_bounds = array<i64: 1, 32, 256>}, {transform_indices = @transform_3, window_bounds = array<i64: 1, 32, 1>}, {transform_indices = @transform_4, window_bounds = array<i64: 1, 32, 1>}]} {
    %c0_i32 = arith.constant 0 : i32
    %0 = arith.cmpi eq, %arg1, %c0_i32 : i32
    %1 = arith.extui %0 : i1 to i32
    %c0_i32_0 = arith.constant 0 : i32
    %2 = arith.cmpi ne, %1, %c0_i32_0 : i32
    scf.if %2 {
      %cst_22 = arith.constant 0.000000e+00 : f32
      %29 = vector.broadcast %cst_22 : f32 to vector<32x1xf32>
      %c0_23 = arith.constant 0 : index
      %c0_24 = arith.constant 0 : index
      %c0_25 = arith.constant 0 : index
      %30 = vector.load %arg5[%c0_23, %c0_24, %c0_25] : memref<1x32x1xf32, #tpu.memory_space<vmem>>, vector<1x32x1xf32>
      %31 = vector.shape_cast %30 : vector<1x32x1xf32> to vector<32x1xf32>
      %32 = vector.shape_cast %29 : vector<32x1xf32> to vector<1x32x1xf32>
      tpu.vector_store %arg5[%c0_23, %c0_24, %c0_25], %32 {strides = array<i32>} : memref<1x32x1xf32, #tpu.memory_space<vmem>>, vector<1x32x1xf32>,
      %cst_26 = arith.constant 0.000000e+00 : f32
      %33 = vector.broadcast %cst_26 : f32 to vector<32x1xf32>
      %c0_27 = arith.constant 0 : index
      %c0_28 = arith.constant 0 : index
      %c0_29 = arith.constant 0 : index
      %34 = vector.load %arg6[%c0_27, %c0_28, %c0_29] : memref<1x32x1xf32, #tpu.memory_space<vmem>>, vector<1x32x1xf32>
      %35 = vector.shape_cast %34 : vector<1x32x1xf32> to vector<32x1xf32>
      %36 = vector.shape_cast %33 : vector<32x1xf32> to vector<1x32x1xf32>
      tpu.vector_store %arg6[%c0_27, %c0_28, %c0_29], %36 {strides = array<i32>} : memref<1x32x1xf32, #tpu.memory_space<vmem>>, vector<1x32x1xf32>,
    } else {
    }
    %c0 = arith.constant 0 : index
    %c0_1 = arith.constant 0 : index
    %c0_2 = arith.constant 0 : index
    %3 = vector.load %arg2[%c0, %c0_1, %c0_2] : memref<1x4x256xf32, #tpu.memory_space<vmem>>, vector<1x4x256xf32>
    %4 = vector.shape_cast %3 : vector<1x4x256xf32> to vector<4x256xf32>
    %5 = arith.truncf %4 : vector<4x256xf32> to vector<4x256xbf16>
    %c0_3 = arith.constant 0 : index
    %c0_4 = arith.constant 0 : index
    %6 = vector.load %arg3[%c0_3, %c0_4] : memref<32x4xbf16, #tpu.memory_space<vmem>>, vector<32x4xbf16>
    %cst = arith.constant dense<0.000000e+00> : vector<32x256xf32>
    %7 = tpu.matmul %6, %5, %cst {dimension_numbers = #tpu.dot_dimension_numbers<[1], [0], [0], [1], [0, 0, 1, 1], [], []>} : vector<32x4xbf16>, vector<4x256xbf16>, vector<32x256xf32> -> vector<32x256xf32>
    %8 = arith.truncf %7 : vector<32x256xf32> to vector<32x256xbf16>
    %c0_5 = arith.constant 0 : index
    %c0_6 = arith.constant 0 : index
    %c0_7 = arith.constant 0 : index
    %9 = vector.load %arg4[%c0_5, %c0_6, %c0_7] : memref<1x32x256xbf16, #tpu.memory_space<vmem>>, vector<1x32x256xbf16>
    %10 = vector.shape_cast %9 : vector<1x32x256xbf16> to vector<32x256xbf16>
    %11 = vector.shape_cast %8 : vector<32x256xbf16> to vector<1x32x256xbf16>
    tpu.vector_store %arg4[%c0_5, %c0_6, %c0_7], %11 {strides = array<i32>} : memref<1x32x256xbf16, #tpu.memory_space<vmem>>, vector<1x32x256xbf16>,
    %c0_8 = arith.constant 0 : index
    %c0_9 = arith.constant 0 : index
    %c0_10 = arith.constant 0 : index
    %12 = vector.load %arg5[%c0_8, %c0_9, %c0_10] : memref<1x32x1xf32, #tpu.memory_space<vmem>>, vector<1x32x1xf32>
    %13 = vector.shape_cast %12 : vector<1x32x1xf32> to vector<32x1xf32>
    %cst_11 = arith.constant dense<0.000000e+00> : vector<32xf32>
    %14 = vector.multi_reduction <add>, %7, %cst_11 [1] : vector<32x256xf32> to vector<32xf32>
    %15 = vector.shape_cast %14 : vector<32xf32> to vector<32x1xf32>
    %16 = arith.addf %13, %15 : vector<32x1xf32>
    %c0_12 = arith.constant 0 : index
    %c0_13 = arith.constant 0 : index
    %c0_14 = arith.constant 0 : index
    %17 = vector.load %arg5[%c0_12, %c0_13, %c0_14] : memref<1x32x1xf32, #tpu.memory_space<vmem>>, vector<1x32x1xf32>
    %18 = vector.shape_cast %17 : vector<1x32x1xf32> to vector<32x1xf32>
    %19 = vector.shape_cast %16 : vector<32x1xf32> to vector<1x32x1xf32>
    tpu.vector_store %arg5[%c0_12, %c0_13, %c0_14], %19 {strides = array<i32>} : memref<1x32x1xf32, #tpu.memory_space<vmem>>, vector<1x32x1xf32>,
    %c0_15 = arith.constant 0 : index
    %c0_16 = arith.constant 0 : index
    %c0_17 = arith.constant 0 : index
    %20 = vector.load %arg6[%c0_15, %c0_16, %c0_17] : memref<1x32x1xf32, #tpu.memory_space<vmem>>, vector<1x32x1xf32>
    %21 = vector.shape_cast %20 : vector<1x32x1xf32> to vector<32x1xf32>
    %22 = arith.mulf %7, %7 : vector<32x256xf32>
    %cst_18 = arith.constant dense<0.000000e+00> : vector<32xf32>
    %23 = vector.multi_reduction <add>, %22, %cst_18 [1] : vector<32x256xf32> to vector<32xf32>
    %24 = vector.shape_cast %23 : vector<32xf32> to vector<32x1xf32>
    %25 = arith.addf %21, %24 : vector<32x1xf32>
    %c0_19 = arith.constant 0 : index
    %c0_20 = arith.constant 0 : index
    %c0_21 = arith.constant 0 : index
    %26 = vector.load %arg6[%c0_19, %c0_20, %c0_21] : memref<1x32x1xf32, #tpu.memory_space<vmem>>, vector<1x32x1xf32>
    %27 = vector.shape_cast %26 : vector<1x32x1xf32> to vector<32x1xf32>
    %28 = vector.shape_cast %25 : vector<32x1xf32> to vector<1x32x1xf32>
    tpu.vector_store %arg6[%c0_19, %c0_20, %c0_21], %28 {strides = array<i32>} : memref<1x32x1xf32, #tpu.memory_space<vmem>>, vector<1x32x1xf32>,
    return
  }
  func.func @transform_0(%arg0: i32, %arg1: i32) -> (i32, i32, i32) {
    %c0_i32 = arith.constant 0 : i32
    %c0_i32_0 = arith.constant 0 : i32
    return %arg0, %c0_i32, %arg1 : i32, i32, i32
  }
  func.func @transform_1(%arg0: i32, %arg1: i32) -> (i32, i32) {
    %c0_i32 = arith.constant 0 : i32
    %c0_i32_0 = arith.constant 0 : i32
    %c0_i32_1 = arith.constant 0 : i32
    return %c0_i32, %c0_i32_0 : i32, i32
  }
  func.func @transform_2(%arg0: i32, %arg1: i32) -> (i32, i32, i32) {
    %c0_i32 = arith.constant 0 : i32
    %c0_i32_0 = arith.constant 0 : i32
    return %arg0, %c0_i32, %arg1 : i32, i32, i32
  }
  func.func @transform_3(%arg0: i32, %arg1: i32) -> (i32, i32, i32) {
    %c0_i32 = arith.constant 0 : i32
    %c0_i32_0 = arith.constant 0 : i32
    %c0_i32_1 = arith.constant 0 : i32
    return %arg0, %c0_i32, %c0_i32_0 : i32, i32, i32
  }
  func.func @transform_4(%arg0: i32, %arg1: i32) -> (i32, i32, i32) {
    %c0_i32 = arith.constant 0 : i32
    %c0_i32_0 = arith.constant 0 : i32
    %c0_i32_1 = arith.constant 0 : i32
    return %arg0, %c0_i32, %c0_i32_0 : i32, i32, i32
  }
}

</mosaic_0001>

<llo_original>
// kernel: tpu_custom_call.1
$region0: #{tpu_custom_call.1}
  #allocation0 [shape = 'u32[]', space=smem, size = 0x4, offset = 0x4, fixed_abs, tag = 'smem constant byte address 0x4 - core index']
  #allocation1 [shape = 'u32[144,128]{1,0:T(1,128)}', space=vmem, size = 0x12000, scoped, tag = 'internal scratch']
  %s0 = inlined_call_operand.vmem [shape: f32[2,4,256], index: 0, kind: input, shape index: {}]
  %s1 = inlined_call_operand.vmem [shape: bf16[32,4], index: 1, kind: input, shape index: {}]
  %s2 = inlined_call_operand.hbm [shape: bf16[2,32,256], index: 2, kind: output, shape index: {0}]
  %s3 = inlined_call_operand.vmem [shape: f32[2,32,1], index: 3, kind: output, shape index: {1}]
  %s4 = inlined_call_operand.vmem [shape: f32[2,32,1], index: 4, kind: output, shape index: {2}]
  %5 = xla_tuple %s2, %s3, %s4
  %s6 = sld [smem:[#allocation0]]
  $region61: #{tpu_custom_call.1} parent=0
    _
  %s8 = ssub.s32 1, %s6
  %s9 = scalar_select 0, %s8, %s6
  $region1: #{tpu_custom_call.1} parent=0
    #allocation2 [shape = 'u8[32768]{0}', space=vmem, size = 0x8000, scoped, tag = 'output window, operand 0']
    #allocation3 [shape = 's32[2]{0}', space=sflag, size = 0x8, scoped, tag = 'scoped memory for tpu_custom_call.1']
    %10 = vsyncpa [#allocation3], 0
    %s11 = scalar_lea.sflag [#allocation3], 1
    %12 = vsyncpa %s11, 0
    loop: start=0, step=1, limit=4
    $region2: #{tpu_custom_call.1} parent=1 // loop_pre_header
      _
    $region3: #{tpu_custom_call.1} parent=1 // loop_header
      %s14 = sphi 0, %s18
      %p15 = scmp.ge.s32.totalorder %s14, 4
      %s21 = sphi 0, %s33
      %s22 = sphi 0, %s29
      %s23 = sphi 0, %s21
      %s24 = sphi 0, %s22
      %s25 = sphi 0, %s23
      %s26 = sphi 0, %s24
      %s38 = sphi 0, %s40
      %s41 = sphi 0, %s38
      %s42 = sphi 0, %s41
      %s58 = sphi 0, %s42
      %s62 = sphi 0, %s62
      %s64 = sphi 0, %s62
      %s65 = sphi 0, %s64
      %s79 = sphi 0, %s65
      %s87 = sphi 0, %s89
      %s90 = sphi 0, %s87
      %s91 = sphi 0, %s90
      %s107 = sphi 0, %s91
      %s113 = sphi 0, %s115
      %s116 = sphi 0, %s113
      %s117 = sphi 0, %s116
      %s133 = sphi 0, %s117
      %s139 = sphi 0, %s141
      %s142 = sphi 0, %s139
      %s143 = sphi 0, %s142
      %s159 = sphi 0, %s143
    $region4: #{tpu_custom_call.1} parent=1 // loop_header_branch
      %17 = sbr.rel (%p15) target = $region8
    $region5: #{tpu_custom_call.1} parent=1 // loop_body
      %s19 = ssub.s32 %s14, 1
      %s20 = ssub.s32 %s14, 2
      %s27 = sadd.s32 1, %s22
      %p28 = scmp.ge.s32.totalorder %s27, 1
      %s29 = scalar_select %p28, 0, %s27
      %s30 = sadd.s32 1, %s21
      %s31 = scalar_select %p28, %s30, %s21
      %p32 = scmp.ge.s32.totalorder %s31, 2
      %s33 = scalar_select %p32, 0, %s31
      %s34 = ssub.s32 %s21, %s33
      %s35 = ssub.s32 %s22, %s29
      %s36 = sor.u32 %s34, %s35
      %p37 = scmp.eq.s32.totalorder %s36, 0
      %s39 = sadd.s32 %s38, 1
      %s40 = scalar_select %p37, %s38, %s39
      %p43 = pneg %p37
      %p44 = scmp.eq.s32.totalorder %s14, 1
      %p45 = por %p43, %p44
      %p46 = scmp.ne.s32.totalorder %s38, %s41
      %p47 = scmp.eq.s32.totalorder %s14, 0
      %p48 = por %p46, %p47
      %p49 = scmp.ne.s32.totalorder %s38, %s41
      %p50 = scmp.eq.s32.totalorder %s19, 1
      %p51 = por %p49, %p50
      %p52 = scmp.ne.s32.totalorder %s41, %s42
      %p53 = scmp.eq.s32.totalorder %s19, 0
      %p54 = por %p52, %p53
      %p55 = scmp.ne.s32.totalorder %s41, %s42
      %p56 = scmp.eq.s32.totalorder %s20, 1
      %p57 = por %p55, %p56
      %p59 = scmp.ne.s32.totalorder %s42, %s58
      %p60 = scmp.eq.s32.totalorder %s20, 0
      %p61 = por %p59, %p60
      %s63 = sadd.s32 %s62, 1
      %p66 = scmp.eq.s32.totalorder %s14, 1
      %p67 = scmp.ne.s32.totalorder %s62, %s64
      %p68 = scmp.eq.s32.totalorder %s14, 0
      %p69 = por %p67, %p68
      %p70 = scmp.ne.s32.totalorder %s62, %s64
      %p71 = scmp.eq.s32.totalorder %s19, 1
      %p72 = por %p70, %p71
      %p73 = scmp.ne.s32.totalorder %s64, %s65
      %p74 = scmp.eq.s32.totalorder %s19, 0
      %p75 = por %p73, %p74
      %p76 = scmp.ne.s32.totalorder %s64, %s65
      %p77 = scmp.eq.s32.totalorder %s20, 1
      %p78 = por %p76, %p77
      %p80 = scmp.ne.s32.totalorder %s65, %s79
      %p81 = scmp.eq.s32.totalorder %s20, 0
      %p82 = por %p80, %p81
      %s83 = ssub.s32 %s21, %s33
      %s84 = ssub.s32 %s22, %s29
      %s85 = sor.u32 %s83, %s84
      %p86 = scmp.eq.s32.totalorder %s85, 0
      %s88 = sadd.s32 %s87, 1
      %s89 = scalar_select %p86, %s87, %s88
      %p92 = pneg %p86
      %p93 = scmp.eq.s32.totalorder %s14, 1
      %p94 = por %p92, %p93
      %p95 = scmp.ne.s32.totalorder %s87, %s90
      %p96 = scmp.eq.s32.totalorder %s14, 0
      %p97 = por %p95, %p96
      %p98 = scmp.ne.s32.totalorder %s87, %s90
      %p99 = scmp.eq.s32.totalorder %s19, 1
      %p100 = por %p98, %p99
      %p101 = scmp.ne.s32.totalorder %s90, %s91
      %p102 = scmp.eq.s32.totalorder %s19, 0
      %p103 = por %p101, %p102
      %p104 = scmp.ne.s32.totalorder %s90, %s91
      %p105 = scmp.eq.s32.totalorder %s20, 1
      %p106 = por %p104, %p105
      %p108 = scmp.ne.s32.totalorder %s91, %s107
      %p109 = scmp.eq.s32.totalorder %s20, 0
      %p110 = por %p108, %p109
      %s111 = ssub.s32 %s21, %s33
      %p112 = scmp.eq.s32.totalorder %s111, 0
      %s114 = sadd.s32 %s113, 1
      %s115 = scalar_select %p112, %s113, %s114
      %p118 = pneg %p112
      %p119 = scmp.eq.s32.totalorder %s14, 1
      %p120 = por %p118, %p119
      %p121 = scmp.ne.s32.totalorder %s113, %s116
      %p122 = scmp.eq.s32.totalorder %s14, 0
      %p123 = por %p121, %p122
      %p124 = scmp.ne.s32.totalorder %s113, %s116
      %p125 = scmp.eq.s32.totalorder %s19, 1
      %p126 = por %p124, %p125
      %p127 = scmp.ne.s32.totalorder %s116, %s117
      %p128 = scmp.eq.s32.totalorder %s19, 0
      %p129 = por %p127, %p128
      %p130 = scmp.ne.s32.totalorder %s116, %s117
      %p131 = scmp.eq.s32.totalorder %s20, 1
      %p132 = por %p130, %p131
      %p134 = scmp.ne.s32.totalorder %s117, %s133
      %p135 = scmp.eq.s32.totalorder %s20, 0
      %p136 = por %p134, %p135
      %s137 = ssub.s32 %s21, %s33
      %p138 = scmp.eq.s32.totalorder %s137, 0
      %s140 = sadd.s32 %s139, 1
      %s141 = scalar_select %p138, %s139, %s140
      %p144 = pneg %p138
      %p145 = scmp.eq.s32.totalorder %s14, 1
      %p146 = por %p144, %p145
      %p147 = scmp.ne.s32.totalorder %s139, %s142
      %p148 = scmp.eq.s32.totalorder %s14, 0
      %p149 = por %p147, %p148
      %p150 = scmp.ne.s32.totalorder %s139, %s142
      %p151 = scmp.eq.s32.totalorder %s19, 1
      %p152 = por %p150, %p151
      %p153 = scmp.ne.s32.totalorder %s142, %s143
      %p154 = scmp.eq.s32.totalorder %s19, 0
      %p155 = por %p153, %p154
      %p156 = scmp.ne.s32.totalorder %s142, %s143
      %p157 = scmp.eq.s32.totalorder %s20, 1
      %p158 = por %p156, %p157
      %p160 = scmp.ne.s32.totalorder %s143, %s159
      %p161 = scmp.eq.s32.totalorder %s20, 0
      %p162 = por %p160, %p161
      %p163 = scmp.le.s32.totalorder 1, %s14
      %p164 = scmp.lt.s32.totalorder %s14, 3
      %p165 = pnand %p163, %p164
      %p166 = pneg %p165
      // Predicated region
      $region9: #{tpu_custom_call.1} parent=5 // pred_check
        _
      $region10: #{tpu_custom_call.1} parent=5 // pred_check_branch
        %168 = sbr.rel (%p165) target = $region12
      $region11: #{tpu_custom_call.1} parent=5 // pred_region
        %s169 = ssub.s32 %s14, 1
        // Predicated region
        $region13: #{tpu_custom_call.1} parent=11 // pred_check
          %p170 = pneg %p75
        $region14: #{tpu_custom_call.1} parent=11 // pred_check_branch
          %172 = sbr.rel (%p170) target = $region16
        $region15: #{tpu_custom_call.1} parent=11 // pred_region
          _
        $region16: #{tpu_custom_call.1} parent=11 // pred_fallthru
          _
      $region12: #{tpu_custom_call.1} parent=5 // pred_fallthru
        _
      %p173 = scmp.lt.s32.totalorder %s14, 2
      // Predicated region
      $region17: #{tpu_custom_call.1} parent=5 // pred_check
        %p174 = pneg %p173
      $region18: #{tpu_custom_call.1} parent=5 // pred_check_branch
        %176 = sbr.rel (%p174) target = $region20
      $region19: #{tpu_custom_call.1} parent=5 // pred_region
        // Predicated region
        $region21: #{tpu_custom_call.1} parent=19 // pred_check
          %p177 = pneg %p48
        $region22: #{tpu_custom_call.1} parent=19 // pred_check_branch
          %179 = sbr.rel (%p177) target = $region24
        $region23: #{tpu_custom_call.1} parent=19 // pred_region
          %s180 = smul.u32 2, %s22
          %p181 = scmp.lt.s32.totalorder %s21, 1
          %s182 = scalar_select %p181, %s21, 1
          %p183 = scmp.lt.s32.totalorder %s180, 1
          %s184 = scalar_select %p183, %s180, 1
          %s185 = smul.addr %s182, 2
          %s186 = sadd.s32 %s184, %s185
          %s187 = smul.addr %s186, 4
          %s188 = scalar_lea.vmem %s0, %s187
          %s189 = smul.u32 2, %s22
        $region24: #{tpu_custom_call.1} parent=19 // pred_fallthru
          _
      $region20: #{tpu_custom_call.1} parent=5 // pred_fallthru
        _
      %p190 = scmp.le.s32.totalorder 1, %s14
      %p191 = scmp.lt.s32.totalorder %s14, 3
      %p192 = pnand %p190, %p191
      %p193 = pneg %p192
      // Predicated region
      $region25: #{tpu_custom_call.1} parent=5 // pred_check
        _
      $region26: #{tpu_custom_call.1} parent=5 // pred_check_branch
        %195 = sbr.rel (%p192) target = $region28
      $region27: #{tpu_custom_call.1} parent=5 // pred_region
        %s196 = ssub.s32 %s14, 1
        %s197 = smul.u32 2, %s24
        %p198 = scmp.lt.s32.totalorder %s23, 1
        %s199 = scalar_select %p198, %s23, 1
        %p200 = scmp.lt.s32.totalorder %s197, 1
        %s201 = scalar_select %p200, %s197, 1
        %s202 = smul.addr %s199, 2
        %s203 = sadd.s32 %s201, %s202
        %s204 = smul.addr %s203, 4
        %s205 = scalar_lea.vmem %s0, %s204
        %p206 = pneg %p54
        %p207 = pneg %p51
        %p208 = pneg %p75
        %p209 = pneg %p72
        %p210 = pneg %p103
        %p211 = pneg %p100
        %s212 = sand.u32 %s90, 1
        %s213 = scalar_lea.sflag [#allocation3], %s212
        %s214 = sand.u32 %s90, 1
        %s215 = smul.addr %s214, 32
        %s216 = scalar_lea.vmem [#allocation2], %s215
        %p217 = pneg %p129
        %p218 = pneg %p126
        %p219 = scmp.lt.s32.totalorder %s23, 1
        %s220 = scalar_select %p219, %s23, 1
        %s221 = smul.addr %s220, 4
        %s222 = smul.addr %s221, 8
        %s223 = scalar_lea.vmem %s3, %s222
        %p224 = pneg %p155
        %p225 = pneg %p152
        %p226 = scmp.lt.s32.totalorder %s23, 1
        %s227 = scalar_select %p226, %s23, 1
        %s228 = smul.addr %s227, 4
        %s229 = smul.addr %s228, 8
        %s230 = scalar_lea.vmem %s4, %s229
        %s231 = smul.u32 2, %s24
        %p232 = scmp.lt.s32.totalorder %s23, 1
        %s233 = scalar_select %p232, %s23, 1
        %p234 = scmp.lt.s32.totalorder %s231, 1
        %s235 = scalar_select %p234, %s231, 1
        %s236 = smul.addr %s233, 2
        %s237 = sadd.s32 %s235, %s236
        %s238 = smul.addr %s237, 4
        %s239 = scalar_lea.vmem %s0, %s238
        %s240 = smul.u32 2, %s24
        %s241 = smul.u32 2, %s24
        %p242 = scmp.lt.s32.totalorder %s23, 1
        %s243 = scalar_select %p242, %s23, 1
        %s244 = smul.addr %s243, 4
        %s245 = smul.addr %s244, 8
        %s246 = scalar_lea.vmem %s3, %s245
        %p247 = scmp.lt.s32.totalorder %s23, 1
        %s248 = scalar_select %p247, %s23, 1
        %s249 = smul.addr %s248, 4
        %s250 = smul.addr %s249, 8
        %s251 = scalar_lea.vmem %s4, %s250
        %p253 = scmp.eq.s32.totalorder %s24, 0
        // Predicated region
        $region29: #{tpu_custom_call.1} parent=27 // pred_check
          %p254 = pneg %p253
        $region30: #{tpu_custom_call.1} parent=27 // pred_check_branch
          %256 = sbr.rel (%p254) target = $region32
        $region31: #{tpu_custom_call.1} parent=27 // pred_region
          %vm257 = vcmask 7168
          %258 = vst.msk [vmem:[%s246] sm:$0xff] %vm257, 0.0
          %259 = vst.msk [vmem:[%s246 + $0x8] sm:$0xff] %vm257, 0.0
          %260 = vst.msk [vmem:[%s246 + $0x10] sm:$0xff] %vm257, 0.0
          %261 = vst.msk [vmem:[%s246 + $0x18] sm:$0xff] %vm257, 0.0
          %262 = vst.msk [vmem:[%s251] sm:$0xff] %vm257, 0.0
          %263 = vst.msk [vmem:[%s251 + $0x8] sm:$0xff] %vm257, 0.0
          %264 = vst.msk [vmem:[%s251 + $0x10] sm:$0xff] %vm257, 0.0
          %265 = vst.msk [vmem:[%s251 + $0x18] sm:$0xff] %vm257, 0.0
        $region32: #{tpu_custom_call.1} parent=27 // pred_fallthru
          _
        %v266 = vld [vmem:[%s239] sm:$0xff]
        %v268 = vcombine.high %v266, %v266
        %v270 = vpack.c.bf16 %v266, %v266
        %v271 = vpack.c.bf16 %v268, %v268
        %v272 = vld [vmem:[%s1] sm:$0xf]
        %v273 = vld [vmem:[%s1 + $0x4] sm:$0xf]
        %v274 = vld [vmem:[%s1 + $0x8] sm:$0xf]
        %v275 = vld [vmem:[%s1 + $0xc] sm:$0xf]
        %v280 = vunpack.c.l.b16 %v272
        %v281 = vunpack.c.l.b16 %v273
        %v282 = vunpack.c.l.b16 %v274
        %v283 = vunpack.c.l.b16 %v275
        %v284 = vpack.c.b16 %v281, %v280
        %v285 = vpack.c.b16 %v283, %v282
        %vm286 = vcmask 31744
        %v288 = vsel %vm286, %v284, 0
        %v291 = vsel %vm286, %v285, 0
        %vm293 = vcmask 1041408
        %v295 = vsel %vm293, %v270, 0
        %v298 = vsel %vm293, %v271, 0
        %300 = vmatprep.subr.bf16.mxu0 %v298
        %301 = vmatpush1.bf16.msra.mxu0 %v295
        %302 = vmatprep.subr.bf16.mxu0 0
        %303 = vmatpush1.bf16.msra.mxu0 0
        %304 = vmatprep.subr.bf16.mxu0 0
        %305 = vmatpush1.bf16.msra.mxu0 0
        %306 = vmatprep.subr.bf16.mxu0 0
        %307 = vmatpush1.bf16.msra.mxu0 0
        %308 = vmatprep.subr.bf16.mxu0 0
        %309 = vmatpush1.bf16.msra.mxu0 0
        %310 = vmatprep.subr.bf16.mxu0 0
        %311 = vmatpush1.bf16.msra.mxu0 0
        %312 = vmatprep.subr.bf16.mxu0 0
        %313 = vmatpush1.bf16.msra.mxu0 0
        %314 = vmatprep.subr.bf16.mxu0 0
        %315 = vmatpush1.bf16.msra.mxu0 0
        %316 = vmatprep.subr.bf16.mxu0 0
        %317 = vmatpush1.bf16.msra.mxu0 0
        %318 = vmatprep.subr.bf16.mxu0 0
        %319 = vmatpush1.bf16.msra.mxu0 0
        %320 = vmatprep.subr.bf16.mxu0 0
        %321 = vmatpush1.bf16.msra.mxu0 0
        %322 = vmatprep.subr.bf16.mxu0 0
        %323 = vmatpush1.bf16.msra.mxu0 0
        %324 = vmatprep.subr.bf16.mxu0 0
        %325 = vmatpush1.bf16.msra.mxu0 0
        %326 = vmatprep.subr.bf16.mxu0 0
        %327 = vmatpush1.bf16.msra.mxu0 0
        %328 = vmatprep.subr.bf16.mxu0 0
        %329 = vmatpush1.bf16.msra.mxu0 0
        %330 = vmatprep.subr.bf16.mxu0 0
        %331 = vmatpush1.bf16.msra.mxu0 0
        %332 = vmatprep.mubr.bf16.mxu0 0
        %333 = vmatmul.mubr.bf16.gmra.mrb[0].mxu0 %v288
        %v334 = vpop.f32.mrb[0].mxu0
        %v335 = vadd.f32 0.0, %v334
        %v336 = vpop.f32.mrb[0].mxu0
        %v337 = vadd.f32 0.0, %v336
        %v338 = vpop.f32.mrb[0].mxu0
        %v339 = vadd.f32 0.0, %v338
        %v340 = vpop.f32.mrb[0].mxu0
        %v341 = vadd.f32 0.0, %v340
        %342 = vmatprep.mubr.bf16.mxu0 0
        %343 = vmatmul.mubr.bf16.gmra.mrb[0].mxu0 %v291
        %v344 = vpop.f32.mrb[0].mxu0
        %v345 = vadd.f32 0.0, %v344
        %v346 = vpop.f32.mrb[0].mxu0
        %v347 = vadd.f32 0.0, %v346
        %v348 = vpop.f32.mrb[0].mxu0
        %v349 = vadd.f32 0.0, %v348
        %v350 = vpop.f32.mrb[0].mxu0
        %v351 = vadd.f32 0.0, %v350
        %352 = vdwg.mxu0
        %v353 = vpack.c.bf16 %v339, %v335
        %v354 = vpack.c.bf16 %v341, %v337
        %v355 = vpack.c.bf16 %v349, %v345
        %v356 = vpack.c.bf16 %v351, %v347
        %v361 = vunpack.c.l.b16 %v353
        %v362 = vunpack.c.l.b16 %v354
        %v363 = vunpack.c.h.b16 %v353
        %v364 = vunpack.c.h.b16 %v354
        %v365 = vunpack.c.l.b16 %v355
        %v366 = vunpack.c.l.b16 %v356
        %v367 = vunpack.c.h.b16 %v355
        %v368 = vunpack.c.h.b16 %v356
        %v369 = vpack.c.b16 %v362, %v361
        %v370 = vpack.c.b16 %v364, %v363
        %v371 = vpack.c.b16 %v366, %v365
        %v372 = vpack.c.b16 %v368, %v367
        %377 = vst [vmem:[%s216] sm:$0xff] %v369
        %378 = vst [vmem:[%s216 + $0x8] sm:$0xff] %v370
        %379 = vst [vmem:[%s216 + $0x10] sm:$0xff] %v371
        %380 = vst [vmem:[%s216 + $0x18] sm:$0xff] %v372
        %v381 = vld [vmem:[%s246] sm:$0xff]
        %v382 = vld [vmem:[%s246 + $0x8] sm:$0xff]
        %v383 = vld [vmem:[%s246 + $0x10] sm:$0xff]
        %v384 = vld [vmem:[%s246 + $0x18] sm:$0xff]
        %v385 = vadd.f32 %v335, %v337
        %386 = vadd.xlane.f32.xlu0 %v385
        %v387 = vpop.xlane.xlu0 %386
        %v388 = vadd.f32 %v339, %v341
        %389 = vadd.xlane.f32.xlu0 %v388
        %v390 = vpop.xlane.xlu0 %389
        %v391 = vadd.f32 %v345, %v347
        %392 = vadd.xlane.f32.xlu0 %v391
        %v393 = vpop.xlane.xlu0 %392
        %v394 = vadd.f32 %v349, %v351
        %395 = vadd.xlane.f32.xlu0 %v394
        %v396 = vpop.xlane.xlu0 %395
        %v397 = vadd.f32 %v381, %v387
        %v398 = vadd.f32 %v382, %v390
        %v399 = vadd.f32 %v383, %v393
        %v400 = vadd.f32 %v384, %v396
        %vm401 = vcmask 7168
        %402 = vst.msk [vmem:[%s246] sm:$0xff] %vm401, %v397
        %403 = vst.msk [vmem:[%s246 + $0x8] sm:$0xff] %vm401, %v398
        %404 = vst.msk [vmem:[%s246 + $0x10] sm:$0xff] %vm401, %v399
        %405 = vst.msk [vmem:[%s246 + $0x18] sm:$0xff] %vm401, %v400
        %v406 = vld [vmem:[%s251] sm:$0xff]
        %v407 = vld [vmem:[%s251 + $0x8] sm:$0xff]
        %v408 = vld [vmem:[%s251 + $0x10] sm:$0xff]
        %v409 = vld [vmem:[%s251 + $0x18] sm:$0xff]
        %v410 = vmul.f32 %v335, %v335
        %v411 = vmul.f32 %v337, %v337
        %v412 = vmul.f32 %v339, %v339
        %v413 = vmul.f32 %v341, %v341
        %v414 = vmul.f32 %v345, %v345
        %v415 = vmul.f32 %v347, %v347
        %v416 = vmul.f32 %v349, %v349
        %v417 = vmul.f32 %v351, %v351
        %v418 = vadd.f32 %v410, %v411
        %419 = vadd.xlane.f32.xlu0 %v418
        %v420 = vpop.xlane.xlu0 %419
        %v421 = vadd.f32 %v412, %v413
        %422 = vadd.xlane.f32.xlu0 %v421
        %v423 = vpop.xlane.xlu0 %422
        %v424 = vadd.f32 %v414, %v415
        %425 = vadd.xlane.f32.xlu0 %v424
        %v426 = vpop.xlane.xlu0 %425
        %v427 = vadd.f32 %v416, %v417
        %428 = vadd.xlane.f32.xlu0 %v427
        %v429 = vpop.xlane.xlu0 %428
        %v430 = vadd.f32 %v406, %v420
        %v431 = vadd.f32 %v407, %v423
        %v432 = vadd.f32 %v408, %v426
        %v433 = vadd.f32 %v409, %v429
        %434 = vst.msk [vmem:[%s251] sm:$0xff] %vm401, %v430
        %435 = vst.msk [vmem:[%s251 + $0x8] sm:$0xff] %vm401, %v431
        %436 = vst.msk [vmem:[%s251 + $0x10] sm:$0xff] %vm401, %v432
        %437 = vst.msk [vmem:[%s251 + $0x18] sm:$0xff] %vm401, %v433
        %s438 = sand.u32 %s90, 1
        %s439 = scalar_lea.sflag [#allocation3], %s438
        %s440 = sand.u32 %s90, 1
        %s441 = smul.addr %s440, 32
        %s442 = scalar_lea.vmem [#allocation2], %s441
        %p443 = scmp.lt.s32.totalorder %s23, 1
        %s444 = scalar_select %p443, %s23, 1
        %s445 = smul.addr %s444, 4
        %s446 = smul.addr %s445, 8
        %s447 = scalar_lea.vmem %s3, %s446
        %p448 = scmp.lt.s32.totalorder %s23, 1
        %s449 = scalar_select %p448, %s23, 1
        %s450 = smul.addr %s449, 4
        %s451 = smul.addr %s450, 8
        %s452 = scalar_lea.vmem %s4, %s451
        // Predicated region
        $region33: #{tpu_custom_call.1} parent=27 // pred_check
          %p453 = pneg %p100
        $region34: #{tpu_custom_call.1} parent=27 // pred_check_branch
          %455 = sbr.rel (%p453) target = $region36
        $region35: #{tpu_custom_call.1} parent=27 // pred_region
          %s456 = smul.u32 2, %s24
          %s458 = ssub.s32 512, 512
          %459 = vsyncadd %s439, %s458
          %s460 = smul.addr %s23, 8
          %s461 = sadd.s32 %s456, %s460
          %s462 = smul.addr %s461, 64
          %s463 = scalar_lea.hbm %s2, %s462
          %s464 = sshll.u32 %s442, 4
          %s465 = int_to_ptr.vmem [resolvable:$true] %s464
          %470 = dma.vmem_to_hbm [thread:$0]  %s465, 512, %s463, %s439, 128, 128, 8
        $region36: #{tpu_custom_call.1} parent=27 // pred_fallthru
          _
        // Predicated region
        $region37: #{tpu_custom_call.1} parent=27 // pred_check
          %p471 = pneg %p126
        $region38: #{tpu_custom_call.1} parent=27 // pred_check_branch
          %473 = sbr.rel (%p471) target = $region40
        $region39: #{tpu_custom_call.1} parent=27 // pred_region
          _
        $region40: #{tpu_custom_call.1} parent=27 // pred_fallthru
          _
        // Predicated region
        $region41: #{tpu_custom_call.1} parent=27 // pred_check
          %p474 = pneg %p152
        $region42: #{tpu_custom_call.1} parent=27 // pred_check_branch
          %476 = sbr.rel (%p474) target = $region44
        $region43: #{tpu_custom_call.1} parent=27 // pred_region
          _
        $region44: #{tpu_custom_call.1} parent=27 // pred_fallthru
          _
      $region28: #{tpu_custom_call.1} parent=5 // pred_fallthru
        _
      %p477 = scmp.le.s32.totalorder 2, %s14
      // Predicated region
      $region45: #{tpu_custom_call.1} parent=5 // pred_check
        %p478 = pneg %p477
      $region46: #{tpu_custom_call.1} parent=5 // pred_check_branch
        %480 = sbr.rel (%p478) target = $region48
      $region47: #{tpu_custom_call.1} parent=5 // pred_region
        %s481 = ssub.s32 %s14, 2
        // Predicated region
        $region49: #{tpu_custom_call.1} parent=47 // pred_check
          %p482 = pneg %p106
        $region50: #{tpu_custom_call.1} parent=47 // pred_check_branch
          %484 = sbr.rel (%p482) target = $region52
        $region51: #{tpu_custom_call.1} parent=47 // pred_region
          %s485 = sand.u32 %s91, 1
          %s486 = scalar_lea.sflag [#allocation3], %s485
          %s487 = sand.u32 %s91, 1
          %s488 = smul.addr %s487, 32
          %s489 = scalar_lea.vmem [#allocation2], %s488
          %490 = dma.done %s486, 512
        $region52: #{tpu_custom_call.1} parent=47 // pred_fallthru
          _
        // Predicated region
        $region53: #{tpu_custom_call.1} parent=47 // pred_check
          %p491 = pneg %p132
        $region54: #{tpu_custom_call.1} parent=47 // pred_check_branch
          %493 = sbr.rel (%p491) target = $region56
        $region55: #{tpu_custom_call.1} parent=47 // pred_region
          %p494 = scmp.lt.s32.totalorder %s25, 1
          %s495 = scalar_select %p494, %s25, 1
          %s496 = smul.addr %s495, 4
          %s497 = smul.addr %s496, 8
          %s498 = scalar_lea.vmem %s3, %s497
        $region56: #{tpu_custom_call.1} parent=47 // pred_fallthru
          _
        // Predicated region
        $region57: #{tpu_custom_call.1} parent=47 // pred_check
          %p499 = pneg %p158
        $region58: #{tpu_custom_call.1} parent=47 // pred_check_branch
          %501 = sbr.rel (%p499) target = $region60
        $region59: #{tpu_custom_call.1} parent=47 // pred_region
          %p502 = scmp.lt.s32.totalorder %s25, 1
          %s503 = scalar_select %p502, %s25, 1
          %s504 = smul.addr %s503, 4
          %s505 = smul.addr %s504, 8
          %s506 = scalar_lea.vmem %s4, %s505
        $region60: #{tpu_custom_call.1} parent=47 // pred_fallthru
          _
      $region48: #{tpu_custom_call.1} parent=5 // pred_fallthru
        _
    $region6: #{tpu_custom_call.1} parent=1 // loop_footer
      %s18 = sadd.s32 1, %s14
    $region7: #{tpu_custom_call.1} parent=1 // loop_footer_branch
      %13 = sbr.rel target = $region3
    $region8: #{tpu_custom_call.1} parent=1 // loop_exit
      _
    %507 = vsyncpa [#allocation3], 1
    %s508 = scalar_lea.sflag [#allocation3], 1
    %509 = vsyncpa %s508, 1

</llo_original>
